<compile_context>
chip_gen: v7x
topology: tpu7x:2x2x1
jax: 0.10.0
libtpu: 0.0.40
codegen_flags: <defaults>
</compile_context>

<pallas_src>
import jax
import jax.numpy as jnp
from jax.experimental import pallas as pl
from jax.experimental.pallas import tpu as pltpu

EPS = 1e-5  # nn.LayerNorm default eps


def _ln_cf_kernel(x_ref, g_ref, b_ref, o_ref):
    """LayerNorm over channels; channels-first in AND out.

    x_ref: (Bb, C, TL)  -- C = embed_dim on sublanes, TL tokens on lanes
    g_ref, b_ref: (C, 1) affine params
    o_ref: (Bb, C, TL)
    """
    x = x_ref[...].astype(jnp.float32)
    # Single pass over the tile: var = E[x^2] - mean^2, f32 accumulation.
    mean = jnp.mean(x, axis=1, keepdims=True)                     # (Bb, 1, TL)
    var = jnp.mean(x * x, axis=1, keepdims=True) - mean * mean
    inv = jax.lax.rsqrt(jnp.maximum(var, 0.0) + EPS)              # (Bb, 1, TL)
    scale = inv * g_ref[...].astype(jnp.float32)                  # (Bb, C, TL)
    y = (x - mean) * scale + b_ref[...].astype(jnp.float32)
    o_ref[...] = y.astype(o_ref.dtype)


def _ln_tr_kernel(x_ref, g_ref, b_ref, o_ref):
    """Same LayerNorm, but the tile is transposed in-kernel (XLU slot) and
    stored directly into the (B, L, C) layout.  Used only when C % 128 == 0,
    so the output store stays lane-dense (no masked sub-128 stores).

    x_ref: (Bb, C, TL);  o_ref: (Bb, TL, C)
    """
    x = x_ref[...].astype(jnp.float32)
    mean = jnp.mean(x, axis=1, keepdims=True)
    var = jnp.mean(x * x, axis=1, keepdims=True) - mean * mean
    inv = jax.lax.rsqrt(jnp.maximum(var, 0.0) + EPS)
    scale = inv * g_ref[...].astype(jnp.float32)
    y = (x - mean) * scale + b_ref[...].astype(jnp.float32)       # (Bb, C, TL)
    o_ref[...] = jnp.transpose(y, (0, 2, 1)).astype(o_ref.dtype)  # (Bb, TL, C)


def _round_up(v, m):
    return ((v + m - 1) // m) * m


def _choose_tiles(B, C, L, itemsize, target_bytes):
    """Pick (batch_block, lane_tile) so one grid step moves ~target_bytes."""
    row_bytes = C * L * itemsize                 # one batch row, all tokens
    if row_bytes >= target_bytes:
        bb = 1
        n_l = max(1, -(-row_bytes // target_bytes))
        tl = _round_up(-(-L // n_l), 128)        # balanced, 128-aligned tiles
        if tl >= L:
            tl = L
    else:
        tl = L
        bb = min(B, max(1, target_bytes // row_bytes))
    # v7x has two TensorCores: make sure the parallel grid has >= 2 points.
    if (-(-B // bb)) * (-(-L // tl)) < 2:
        if B > 1:
            bb = -(-B // 2)
        elif L > 128:
            t = _round_up(-(-L // 2), 128)
            if t < L:
                tl = t
    return bb, tl


def patch_embed_forward(x, gamma, beta, *, target_block_bytes=2 * 1024 * 1024):
    """PatchEmbed.forward with norm_layer=LayerNorm.

    x:     (B, embed_dim, H, W)  (NCHW, same as PyTorch)
    gamma: (embed_dim,)          LayerNorm weight
    beta:  (embed_dim,)          LayerNorm bias
    returns (B, H*W, embed_dim)
    """
    B, C, H, W = x.shape
    L = H * W
    itemsize = jnp.dtype(x.dtype).itemsize

    x3 = x.reshape(B, C, L)        # free collapse of contiguous trailing dims
    g2 = gamma.reshape(C, 1)
    b2 = beta.reshape(C, 1)

    bb, tl = _choose_tiles(B, C, L, itemsize, target_block_bytes)
    grid = (pl.cdiv(B, bb), pl.cdiv(L, tl))

    # Double-buffered in + out footprint, plus headroom.  Explicit limit lifts
    # v5e's 16 MiB default and stays well under v7x's 64 MiB physical VMEM.
    block_bytes = bb * C * tl * itemsize
    vmem_limit = int(min(48 * 1024 * 1024, max(32 * 1024 * 1024, 8 * block_bytes)))

    n_tokens = B * L
    cost = pl.CostEstimate(
        flops=8 * n_tokens * C,
        transcendentals=n_tokens,
        bytes_accessed=2 * n_tokens * C * itemsize,
    )
    cparams = pltpu.CompilerParams(
        dimension_semantics=("parallel", "parallel"),
        vmem_limit_bytes=vmem_limit,
    )

    in_specs = [
        pl.BlockSpec((bb, C, tl), lambda b, l: (b, 0, l)),
        pl.BlockSpec((C, 1), lambda b, l: (0, 0)),
        pl.BlockSpec((C, 1), lambda b, l: (0, 0)),
    ]

    # Transposed (direct (B, L, C)) store only when it stays lane-dense.
    if C % 128 == 0 and tl % 8 == 0:
        return pl.pallas_call(
            _ln_tr_kernel,
            out_shape=jax.ShapeDtypeStruct((B, L, C), x.dtype),
            grid_spec=pl.GridSpec(
                grid=grid,
                in_specs=in_specs,
                out_specs=pl.BlockSpec((bb, tl, C), lambda b, l: (b, l, 0)),
            ),
            compiler_params=cparams,
            cost_estimate=cost,
        )(x3, g2, b2)

    out_cl = pl.pallas_call(
        _ln_cf_kernel,
        out_shape=jax.ShapeDtypeStruct((B, C, L), x.dtype),
        grid_spec=pl.GridSpec(
            grid=grid,
            in_specs=in_specs,
            out_specs=pl.BlockSpec((bb, C, tl), lambda b, l: (b, 0, l)),
        ),
        compiler_params=cparams,
        cost_estimate=cost,
    )(x3, g2, b2)
    # C not a multiple of 128: an in-kernel C-wide store would be a masked
    # sub-128 lane store (measured 4.5x regression), so keep the kernel output
    # lane-dense and let XLA do / fuse the (B,C,L)->(B,L,C) permute downstream.
    return jnp.transpose(out_cl, (0, 2, 1))


def _reference(x, gamma, beta):
    B, C, H, W = x.shape
    t = jnp.transpose(x.reshape(B, C, H * W), (0, 2, 1)).astype(jnp.float32)
    mean = jnp.mean(t, axis=-1, keepdims=True)
    var = jnp.mean((t - mean) ** 2, axis=-1, keepdims=True)
    return ((t - mean) * jax.lax.rsqrt(var + EPS) * gamma + beta).astype(x.dtype)


if __name__ == "__main__":
    key = jax.random.PRNGKey(0)

    # Case 1: embed_dim=32 (not 128-aligned) -> channels-first kernel output +
    # downstream permute.  Input is the already-projected NCHW feature map,
    # e.g. img_size=64, patch_size=4, embed_dim=32 -> (B, 32, 16, 16).
    B, C, H, W = 2, 32, 16, 16
    kx, kg, kb = jax.random.split(key, 3)
    x = jax.random.normal(kx, (B, C, H, W), dtype=jnp.float32)
    # deterministic synthetic LayerNorm parameters (not checkpoint values)
    gamma = 1.0 + 0.1 * jax.random.normal(kg, (C,), dtype=jnp.float32)
    beta = 0.1 * jax.random.normal(kb, (C,), dtype=jnp.float32)

    ref = _reference(x, gamma, beta)
    out = jax.block_until_ready(patch_embed_forward(x, gamma, beta))
    assert out.shape == (B, H * W, C)
    assert jnp.allclose(out, ref, atol=1e-4, rtol=1e-5)

    # Same shapes, tiny target block -> multi-step (2, 2) grid (exercises the
    # tiled pipeline path with 128-wide lane tiles).
    out_t = jax.block_until_ready(
        patch_embed_forward(x, gamma, beta, target_block_bytes=16 * 1024))
    assert jnp.allclose(out_t, ref, atol=1e-4, rtol=1e-5)

    # Case 2: embed_dim=128 (128-aligned), B=1 -> in-kernel XLU transpose path
    # plus the forced >=2-point grid for v7x dual TensorCores.
    B2, C2, H2, W2 = 1, 128, 16, 16
    kx2, kg2, kb2 = jax.random.split(jax.random.PRNGKey(1), 3)
    x2 = jax.random.normal(kx2, (B2, C2, H2, W2), dtype=jnp.float32)
    gamma2 = 1.0 + 0.1 * jax.random.normal(kg2, (C2,), dtype=jnp.float32)
    beta2 = 0.1 * jax.random.normal(kb2, (C2,), dtype=jnp.float32)
    out2 = jax.block_until_ready(patch_embed_forward(x2, gamma2, beta2))
    ref2 = _reference(x2, gamma2, beta2)
    assert out2.shape == (B2, H2 * W2, C2)
    assert jnp.allclose(out2, ref2, atol=1e-4, rtol=1e-5)

    # Case 3: B=4 -> batch-blocked tiles (Bb=2) in the channels-first kernel.
    B3 = 4
    x3_in = jax.random.normal(jax.random.PRNGKey(2), (B3, C, H, W), dtype=jnp.float32)
    out3 = jax.block_until_ready(patch_embed_forward(x3_in, gamma, beta))
    ref3 = _reference(x3_in, gamma, beta)
    assert jnp.allclose(out3, ref3, atol=1e-4, rtol=1e-5)

    print("KERNEL_OK")
</pallas_src>

<mosaic_0001>
module attributes {stable_mosaic.version = 11 : i64} {
  func.func @_ln_cf_kernel(%arg0: i32, %arg1: i32, %arg2: memref<1x32x256xf32, #tpu.memory_space<vmem>>, %arg3: memref<32x1xf32, #tpu.memory_space<vmem>>, %arg4: memref<32x1xf32, #tpu.memory_space<vmem>>, %arg5: memref<1x32x256xf32, #tpu.memory_space<vmem>>) attributes {dimension_semantics = [#tpu.dimension_semantics<parallel>, #tpu.dimension_semantics<parallel>], iteration_bounds = array<i64: 2, 1>, scalar_prefetch = 0 : i64, scratch_operands = 0 : i64, tpu.core_type = #tpu.core_type<tc>, window_params = [{transform_indices = @transform_0, window_bounds = array<i64: 1, 32, 256>}, {pipeline_mode = #tpu.pipeline_mode<synchronous>, transform_indices = @transform_1, window_bounds = array<i64: 32, 1>}, {pipeline_mode = #tpu.pipeline_mode<synchronous>, transform_indices = @transform_2, window_bounds = array<i64: 32, 1>}, {transform_indices = @transform_3, window_bounds = array<i64: 1, 32, 256>}]} {
    %c0 = arith.constant 0 : index
    %c0_0 = arith.constant 0 : index
    %c0_1 = arith.constant 0 : index
    %0 = vector.load %arg2[%c0, %c0_0, %c0_1] : memref<1x32x256xf32, #tpu.memory_space<vmem>>, vector<1x32x256xf32>
    %cst = arith.constant dense<0.000000e+00> : vector<1x256xf32>
    %1 = vector.multi_reduction <add>, %0, %cst [1] : vector<1x32x256xf32> to vector<1x256xf32>
    %2 = vector.shape_cast %1 : vector<1x256xf32> to vector<1x1x256xf32>
    %cst_2 = arith.constant 3.200000e+01 : f32
    %3 = vector.broadcast %cst_2 : f32 to vector<1x1x256xf32>
    %4 = arith.divf %2, %3 : vector<1x1x256xf32>
    %5 = arith.mulf %0, %0 : vector<1x32x256xf32>
    %cst_3 = arith.constant dense<0.000000e+00> : vector<1x256xf32>
    %6 = vector.multi_reduction <add>, %5, %cst_3 [1] : vector<1x32x256xf32> to vector<1x256xf32>
    %7 = vector.shape_cast %6 : vector<1x256xf32> to vector<1x1x256xf32>
    %cst_4 = arith.constant 3.200000e+01 : f32
    %8 = vector.broadcast %cst_4 : f32 to vector<1x1x256xf32>
    %9 = arith.divf %7, %8 : vector<1x1x256xf32>
    %10 = arith.mulf %4, %4 : vector<1x1x256xf32>
    %11 = arith.subf %9, %10 : vector<1x1x256xf32>
    %cst_5 = arith.constant 0.000000e+00 : f32
    %12 = vector.broadcast %cst_5 : f32 to vector<1x1x256xf32>
    %13 = arith.maximumf %11, %12 : vector<1x1x256xf32>
    %cst_6 = arith.constant 9.99999974E-6 : f32
    %14 = vector.broadcast %cst_6 : f32 to vector<1x1x256xf32>
    %15 = arith.addf %13, %14 : vector<1x1x256xf32>
    %16 = math.rsqrt %15 : vector<1x1x256xf32>
    %c0_7 = arith.constant 0 : index
    %c0_8 = arith.constant 0 : index
    %17 = vector.load %arg3[%c0_7, %c0_8] : memref<32x1xf32, #tpu.memory_space<vmem>>, vector<32x1xf32>
    %18 = vector.shape_cast %17 : vector<32x1xf32> to vector<1x32x1xf32>
    %19 = vector.broadcast %16 : vector<1x1x256xf32> to vector<1x32x256xf32>
    %20 = vector.broadcast %18 : vector<1x32x1xf32> to vector<1x32x256xf32>
    %21 = arith.mulf %19, %20 : vector<1x32x256xf32>
    %22 = vector.broadcast %4 : vector<1x1x256xf32> to vector<1x32x256xf32>
    %23 = arith.subf %0, %22 : vector<1x32x256xf32>
    %24 = arith.mulf %23, %21 : vector<1x32x256xf32>
    %c0_9 = arith.constant 0 : index
    %c0_10 = arith.constant 0 : index
    %25 = vector.load %arg4[%c0_9, %c0_10] : memref<32x1xf32, #tpu.memory_space<vmem>>, vector<32x1xf32>
    %26 = vector.shape_cast %25 : vector<32x1xf32> to vector<1x32x1xf32>
    %27 = vector.broadcast %26 : vector<1x32x1xf32> to vector<1x32x256xf32>
    %28 = arith.addf %24, %27 : vector<1x32x256xf32>
    %c0_11 = arith.constant 0 : index
    %c0_12 = arith.constant 0 : index
    %c0_13 = arith.constant 0 : index
    %29 = vector.load %arg5[%c0_11, %c0_12, %c0_13] : memref<1x32x256xf32, #tpu.memory_space<vmem>>, vector<1x32x256xf32>
    tpu.vector_store %arg5[%c0_11, %c0_12, %c0_13], %28 {strides = array<i32>} : memref<1x32x256xf32, #tpu.memory_space<vmem>>, vector<1x32x256xf32>,
    return
  }
  func.func @transform_0(%arg0: i32, %arg1: i32) -> (i32, i32, i32) {
    %c0_i32 = arith.constant 0 : i32
    %c0_i32_0 = arith.constant 0 : i32
    return %arg0, %c0_i32, %arg1 : i32, i32, i32
  }
  func.func @transform_1(%arg0: i32, %arg1: i32) -> (i32, i32) {
    %c0_i32 = arith.constant 0 : i32
    %c0_i32_0 = arith.constant 0 : i32
    %c0_i32_1 = arith.constant 0 : i32
    return %c0_i32, %c0_i32_0 : i32, i32
  }
  func.func @transform_2(%arg0: i32, %arg1: i32) -> (i32, i32) {
    %c0_i32 = arith.constant 0 : i32
    %c0_i32_0 = arith.constant 0 : i32
    %c0_i32_1 = arith.constant 0 : i32
    return %c0_i32, %c0_i32_0 : i32, i32
  }
  func.func @transform_3(%arg0: i32, %arg1: i32) -> (i32, i32, i32) {
    %c0_i32 = arith.constant 0 : i32
    %c0_i32_0 = arith.constant 0 : i32
    return %arg0, %c0_i32, %arg1 : i32, i32, i32
  }
}

</mosaic_0001>

<llo_original>
// kernel: tpu_custom_call.1
$region0: #{tpu_custom_call.1}
  #allocation0 [shape = 'u32[]', space=smem, size = 0x4, offset = 0x4, fixed_abs, tag = 'smem constant byte address 0x4 - core index']
  #allocation1 [shape = 'u32[144,128]{1,0:T(1,128)}', space=vmem, size = 0x12000, scoped, tag = 'internal scratch']
  %s0 = inlined_call_operand.hbm [shape: f32[2,32,256], index: 0, kind: input, shape index: {}]
  %s1 = inlined_call_operand.vmem [shape: f32[32,1], index: 1, kind: input, shape index: {}]
  %s2 = inlined_call_operand.vmem [shape: f32[32,1], index: 2, kind: input, shape index: {}]
  %s3 = inlined_call_operand.hbm [shape: f32[2,32,256], index: 3, kind: output, shape index: {}]
  %s4 = sld [smem:[#allocation0]]
  $region49: #{tpu_custom_call.1} parent=0
    _
  %s6 = ssub.s32 1, %s4
  %s7 = scalar_select 0, %s6, %s4
  $region1: #{tpu_custom_call.1} parent=0
    #allocation2 [shape = 'u8[65536]{0}', space=vmem, size = 0x10000, scoped, tag = 'input window, operand 0']
    #allocation3 [shape = 's32[2]{0}', space=sflag, size = 0x8, scoped, tag = 'scoped memory for tpu_custom_call.1']
    #allocation4 [shape = 's32[2]{0}', space=sflag, size = 0x8, scoped, tag = 'scoped memory for tpu_custom_call.1']
    #allocation5 [shape = 'u8[65536]{0}', space=vmem, size = 0x10000, scoped, tag = 'output window, operand 0']
    %8 = vsyncpa [#allocation3], 0
    %s9 = scalar_lea.sflag [#allocation3], 1
    %10 = vsyncpa %s9, 0
    %11 = vsyncpa [#allocation4], 0
    %s12 = scalar_lea.sflag [#allocation4], 1
    %13 = vsyncpa %s12, 0
    loop: start=0, step=1, limit=4
    $region2: #{tpu_custom_call.1} parent=1 // loop_pre_header
      _
    $region3: #{tpu_custom_call.1} parent=1 // loop_header
      %s15 = sphi 0, %s19
      %p16 = scmp.ge.s32.totalorder %s15, 4
      %s22 = sphi 0, %s34
      %s23 = sphi 0, %s30
      %s24 = sphi 0, %s22
      %s25 = sphi 0, %s23
      %s26 = sphi 0, %s24
      %s27 = sphi 0, %s25
      %s39 = sphi 0, %s41
      %s42 = sphi 0, %s39
      %s43 = sphi 0, %s42
      %s59 = sphi 0, %s43
      %s63 = sphi 0, %s63
      %s65 = sphi 0, %s63
      %s66 = sphi 0, %s65
      %s80 = sphi 0, %s66
      %s84 = sphi 0, %s84
      %s86 = sphi 0, %s84
      %s87 = sphi 0, %s86
      %s101 = sphi 0, %s87
      %s109 = sphi 0, %s111
      %s112 = sphi 0, %s109
      %s113 = sphi 0, %s112
      %s129 = sphi 0, %s113
    $region4: #{tpu_custom_call.1} parent=1 // loop_header_branch
      %18 = sbr.rel (%p16) target = $region8
    $region5: #{tpu_custom_call.1} parent=1 // loop_body
      %s20 = ssub.s32 %s15, 1
      %s21 = ssub.s32 %s15, 2
      %s28 = sadd.s32 1, %s23
      %p29 = scmp.ge.s32.totalorder %s28, 1
      %s30 = scalar_select %p29, 0, %s28
      %s31 = sadd.s32 1, %s22
      %s32 = scalar_select %p29, %s31, %s22
      %p33 = scmp.ge.s32.totalorder %s32, 2
      %s34 = scalar_select %p33, 0, %s32
      %s35 = ssub.s32 %s22, %s34
      %s36 = ssub.s32 %s23, %s30
      %s37 = sor.u32 %s35, %s36
      %p38 = scmp.eq.s32.totalorder %s37, 0
      %s40 = sadd.s32 %s39, 1
      %s41 = scalar_select %p38, %s39, %s40
      %p44 = pneg %p38
      %p45 = scmp.eq.s32.totalorder %s15, 1
      %p46 = por %p44, %p45
      %p47 = scmp.ne.s32.totalorder %s39, %s42
      %p48 = scmp.eq.s32.totalorder %s15, 0
      %p49 = por %p47, %p48
      %p50 = scmp.ne.s32.totalorder %s39, %s42
      %p51 = scmp.eq.s32.totalorder %s20, 1
      %p52 = por %p50, %p51
      %p53 = scmp.ne.s32.totalorder %s42, %s43
      %p54 = scmp.eq.s32.totalorder %s20, 0
      %p55 = por %p53, %p54
      %p56 = scmp.ne.s32.totalorder %s42, %s43
      %p57 = scmp.eq.s32.totalorder %s21, 1
      %p58 = por %p56, %p57
      %p60 = scmp.ne.s32.totalorder %s43, %s59
      %p61 = scmp.eq.s32.totalorder %s21, 0
      %p62 = por %p60, %p61
      %s64 = sadd.s32 %s63, 1
      %p67 = scmp.eq.s32.totalorder %s15, 1
      %p68 = scmp.ne.s32.totalorder %s63, %s65
      %p69 = scmp.eq.s32.totalorder %s15, 0
      %p70 = por %p68, %p69
      %p71 = scmp.ne.s32.totalorder %s63, %s65
      %p72 = scmp.eq.s32.totalorder %s20, 1
      %p73 = por %p71, %p72
      %p74 = scmp.ne.s32.totalorder %s65, %s66
      %p75 = scmp.eq.s32.totalorder %s20, 0
      %p76 = por %p74, %p75
      %p77 = scmp.ne.s32.totalorder %s65, %s66
      %p78 = scmp.eq.s32.totalorder %s21, 1
      %p79 = por %p77, %p78
      %p81 = scmp.ne.s32.totalorder %s66, %s80
      %p82 = scmp.eq.s32.totalorder %s21, 0
      %p83 = por %p81, %p82
      %s85 = sadd.s32 %s84, 1
      %p88 = scmp.eq.s32.totalorder %s15, 1
      %p89 = scmp.ne.s32.totalorder %s84, %s86
      %p90 = scmp.eq.s32.totalorder %s15, 0
      %p91 = por %p89, %p90
      %p92 = scmp.ne.s32.totalorder %s84, %s86
      %p93 = scmp.eq.s32.totalorder %s20, 1
      %p94 = por %p92, %p93
      %p95 = scmp.ne.s32.totalorder %s86, %s87
      %p96 = scmp.eq.s32.totalorder %s20, 0
      %p97 = por %p95, %p96
      %p98 = scmp.ne.s32.totalorder %s86, %s87
      %p99 = scmp.eq.s32.totalorder %s21, 1
      %p100 = por %p98, %p99
      %p102 = scmp.ne.s32.totalorder %s87, %s101
      %p103 = scmp.eq.s32.totalorder %s21, 0
      %p104 = por %p102, %p103
      %s105 = ssub.s32 %s22, %s34
      %s106 = ssub.s32 %s23, %s30
      %s107 = sor.u32 %s105, %s106
      %p108 = scmp.eq.s32.totalorder %s107, 0
      %s110 = sadd.s32 %s109, 1
      %s111 = scalar_select %p108, %s109, %s110
      %p114 = pneg %p108
      %p115 = scmp.eq.s32.totalorder %s15, 1
      %p116 = por %p114, %p115
      %p117 = scmp.ne.s32.totalorder %s109, %s112
      %p118 = scmp.eq.s32.totalorder %s15, 0
      %p119 = por %p117, %p118
      %p120 = scmp.ne.s32.totalorder %s109, %s112
      %p121 = scmp.eq.s32.totalorder %s20, 1
      %p122 = por %p120, %p121
      %p123 = scmp.ne.s32.totalorder %s112, %s113
      %p124 = scmp.eq.s32.totalorder %s20, 0
      %p125 = por %p123, %p124
      %p126 = scmp.ne.s32.totalorder %s112, %s113
      %p127 = scmp.eq.s32.totalorder %s21, 1
      %p128 = por %p126, %p127
      %p130 = scmp.ne.s32.totalorder %s113, %s129
      %p131 = scmp.eq.s32.totalorder %s21, 0
      %p132 = por %p130, %p131
      %p133 = scmp.le.s32.totalorder 1, %s15
      %p134 = scmp.lt.s32.totalorder %s15, 3
      %p135 = pnand %p133, %p134
      %p136 = pneg %p135
      // Predicated region
      $region9: #{tpu_custom_call.1} parent=5 // pred_check
        _
      $region10: #{tpu_custom_call.1} parent=5 // pred_check_branch
        %138 = sbr.rel (%p135) target = $region12
      $region11: #{tpu_custom_call.1} parent=5 // pred_region
        %s139 = ssub.s32 %s15, 1
        // Predicated region
        $region13: #{tpu_custom_call.1} parent=11 // pred_check
          %p140 = pneg %p76
        $region14: #{tpu_custom_call.1} parent=11 // pred_check_branch
          %142 = sbr.rel (%p140) target = $region16
        $region15: #{tpu_custom_call.1} parent=11 // pred_region
          _
        $region16: #{tpu_custom_call.1} parent=11 // pred_fallthru
          _
        // Predicated region
        $region17: #{tpu_custom_call.1} parent=11 // pred_check
          %p143 = pneg %p97
        $region18: #{tpu_custom_call.1} parent=11 // pred_check_branch
          %145 = sbr.rel (%p143) target = $region20
        $region19: #{tpu_custom_call.1} parent=11 // pred_region
          _
        $region20: #{tpu_custom_call.1} parent=11 // pred_fallthru
          _
      $region12: #{tpu_custom_call.1} parent=5 // pred_fallthru
        _
      %p146 = scmp.lt.s32.totalorder %s15, 2
      // Predicated region
      $region21: #{tpu_custom_call.1} parent=5 // pred_check
        %p147 = pneg %p146
      $region22: #{tpu_custom_call.1} parent=5 // pred_check_branch
        %149 = sbr.rel (%p147) target = $region24
      $region23: #{tpu_custom_call.1} parent=5 // pred_region
        // Predicated region
        $region25: #{tpu_custom_call.1} parent=23 // pred_check
          %p150 = pneg %p49
        $region26: #{tpu_custom_call.1} parent=23 // pred_check_branch
          %152 = sbr.rel (%p150) target = $region28
        $region27: #{tpu_custom_call.1} parent=23 // pred_region
          %s153 = sand.u32 %s39, 1
          %s154 = scalar_lea.sflag [#allocation3], %s153
          %s155 = sand.u32 %s39, 1
          %s156 = smul.addr %s155, 64
          %s157 = scalar_lea.vmem [#allocation2], %s156
          %s158 = smul.u32 2, %s23
          %s160 = ssub.s32 1024, 1024
          %161 = vsyncadd %s154, %s160
          %s162 = smul.addr %s22, 8
          %s163 = sadd.s32 %s158, %s162
          %s164 = smul.addr %s163, 128
          %s165 = scalar_lea.hbm %s0, %s164
          %s166 = sshll.u32 %s157, 4
          %s167 = int_to_ptr.vmem [resolvable:$true] %s166
          %172 = dma.hbm_to_vmem [thread:$0]  %s165, 1024, %s167, %s154, 256, 256, 16
        $region28: #{tpu_custom_call.1} parent=23 // pred_fallthru
          _
      $region24: #{tpu_custom_call.1} parent=5 // pred_fallthru
        _
      %p173 = scmp.le.s32.totalorder 1, %s15
      %p174 = scmp.lt.s32.totalorder %s15, 3
      %p175 = pnand %p173, %p174
      %p176 = pneg %p175
      // Predicated region
      $region29: #{tpu_custom_call.1} parent=5 // pred_check
        _
      $region30: #{tpu_custom_call.1} parent=5 // pred_check_branch
        %178 = sbr.rel (%p175) target = $region32
      $region31: #{tpu_custom_call.1} parent=5 // pred_region
        %s179 = ssub.s32 %s15, 1
        %s180 = sand.u32 %s42, 1
        %s181 = scalar_lea.sflag [#allocation3], %s180
        %s182 = sand.u32 %s42, 1
        %s183 = smul.addr %s182, 64
        %s184 = scalar_lea.vmem [#allocation2], %s183
        // Predicated region
        $region33: #{tpu_custom_call.1} parent=31 // pred_check
          %p185 = pneg %p55
        $region34: #{tpu_custom_call.1} parent=31 // pred_check_branch
          %187 = sbr.rel (%p185) target = $region36
        $region35: #{tpu_custom_call.1} parent=31 // pred_region
          %188 = dma.done %s181, 1024
        $region36: #{tpu_custom_call.1} parent=31 // pred_fallthru
          _
        %s189 = sand.u32 %s42, 1
        %s190 = scalar_lea.sflag [#allocation3], %s189
        %s191 = sand.u32 %s42, 1
        %s192 = smul.addr %s191, 64
        %s193 = scalar_lea.vmem [#allocation2], %s192
        %p194 = pneg %p55
        %p195 = pneg %p52
        %p196 = pneg %p76
        %p197 = pneg %p73
        %p198 = pneg %p97
        %p199 = pneg %p94
        %p200 = pneg %p125
        %p201 = pneg %p122
        %s202 = sand.u32 %s112, 1
        %s203 = scalar_lea.sflag [#allocation4], %s202
        %s204 = sand.u32 %s112, 1
        %s205 = smul.addr %s204, 64
        %s206 = scalar_lea.vmem [#allocation5], %s205
        %s207 = smul.u32 2, %s25
        %s208 = smul.u32 2, %s25
        %v209 = vld [vmem:[%s184] sm:$0xff]
        %v210 = vld [vmem:[%s184 + $0x8] sm:$0xff]
        %v211 = vld [vmem:[%s184 + $0x10] sm:$0xff]
        %v212 = vld [vmem:[%s184 + $0x18] sm:$0xff]
        %v213 = vld [vmem:[%s184 + $0x20] sm:$0xff]
        %v214 = vld [vmem:[%s184 + $0x28] sm:$0xff]
        %v215 = vld [vmem:[%s184 + $0x30] sm:$0xff]
        %v216 = vld [vmem:[%s184 + $0x38] sm:$0xff]
        %v217 = vadd.f32 %v209, %v211
        %v218 = vadd.f32 %v217, %v213
        %v219 = vadd.f32 %v218, %v215
        %v220 = vrot.slane %v219, 4
        %v221 = vadd.f32 %v219, %v220
        %v222 = vrot.slane %v221, 2
        %v223 = vadd.f32 %v221, %v222
        %v224 = vrot.slane %v223, 1
        %v225 = vadd.f32 %v223, %v224
        %v226 = vadd.f32 %v210, %v212
        %v227 = vadd.f32 %v226, %v214
        %v228 = vadd.f32 %v227, %v216
        %v229 = vrot.slane %v228, 4
        %v230 = vadd.f32 %v228, %v229
        %v231 = vrot.slane %v230, 2
        %v232 = vadd.f32 %v230, %v231
        %v233 = vrot.slane %v232, 1
        %v234 = vadd.f32 %v232, %v233
        %v235 = vrcp.pop 32.0
        %v236 = vmul.f32 %v225, %v235
        %v237 = vmul.f32 %v234, %v235
        %v238 = vmul.f32 %v209, %v209
        %v239 = vmul.f32 %v210, %v210
        %v240 = vmul.f32 %v211, %v211
        %v241 = vmul.f32 %v212, %v212
        %v242 = vmul.f32 %v213, %v213
        %v243 = vmul.f32 %v214, %v214
        %v244 = vmul.f32 %v215, %v215
        %v245 = vmul.f32 %v216, %v216
        %v246 = vadd.f32 %v238, %v240
        %v247 = vadd.f32 %v246, %v242
        %v248 = vadd.f32 %v247, %v244
        %v249 = vrot.slane %v248, 4
        %v250 = vadd.f32 %v248, %v249
        %v251 = vrot.slane %v250, 2
        %v252 = vadd.f32 %v250, %v251
        %v253 = vrot.slane %v252, 1
        %v254 = vadd.f32 %v252, %v253
        %v255 = vadd.f32 %v239, %v241
        %v256 = vadd.f32 %v255, %v243
        %v257 = vadd.f32 %v256, %v245
        %v258 = vrot.slane %v257, 4
        %v259 = vadd.f32 %v257, %v258
        %v260 = vrot.slane %v259, 2
        %v261 = vadd.f32 %v259, %v260
        %v262 = vrot.slane %v261, 1
        %v263 = vadd.f32 %v261, %v262
        %v264 = vmul.f32 %v254, %v235
        %v265 = vmul.f32 %v263, %v235
        %v266 = vmul.f32 %v236, %v236
        %v267 = vmul.f32 %v237, %v237
        %v268 = vsub.f32 %v264, %v266
        %v269 = vsub.f32 %v265, %v267
        %v270 = vmax.f32 %v268, 0.0
        %v271 = vmax.f32 %v269, 0.0
        %v272 = vadd.f32 %v270, 1e-05
        %v273 = vadd.f32 %v271, 1e-05
        %v274 = vrsqrt.pop %v272
        %v275 = vrsqrt.pop %v273
        %v276 = vld [vmem:[%s1] sm:$0xff]
        %v277 = vld [vmem:[%s1 + $0x8] sm:$0xff]
        %v278 = vld [vmem:[%s1 + $0x10] sm:$0xff]
        %v279 = vld [vmem:[%s1 + $0x18] sm:$0xff]
        %281 = vset.pattern.permute.xlu0 0
        %282 = vperm.xlu0 %281, %v276
        %v283 = vpop.permute.xlu0 %282
        %286 = vset.pattern.permute.xlu0 0
        %287 = vperm.xlu0 %286, %v277
        %v288 = vpop.permute.xlu0 %287
        %291 = vset.pattern.permute.xlu0 0
        %292 = vperm.xlu0 %291, %v278
        %v293 = vpop.permute.xlu0 %292
        %296 = vset.pattern.permute.xlu0 0
        %297 = vperm.xlu0 %296, %v279
        %v298 = vpop.permute.xlu0 %297
        %v300 = vmul.f32 %v274, %v283
        %v301 = vmul.f32 %v275, %v283
        %v302 = vmul.f32 %v274, %v288
        %v303 = vmul.f32 %v275, %v288
        %v304 = vmul.f32 %v274, %v293
        %v305 = vmul.f32 %v275, %v293
        %v306 = vmul.f32 %v274, %v298
        %v307 = vmul.f32 %v275, %v298
        %v308 = vsub.f32 %v209, %v236
        %v309 = vsub.f32 %v210, %v237
        %v310 = vsub.f32 %v211, %v236
        %v311 = vsub.f32 %v212, %v237
        %v312 = vsub.f32 %v213, %v236
        %v313 = vsub.f32 %v214, %v237
        %v314 = vsub.f32 %v215, %v236
        %v315 = vsub.f32 %v216, %v237
        %v316 = vmul.f32 %v308, %v300
        %v317 = vmul.f32 %v309, %v301
        %v318 = vmul.f32 %v310, %v302
        %v319 = vmul.f32 %v311, %v303
        %v320 = vmul.f32 %v312, %v304
        %v321 = vmul.f32 %v313, %v305
        %v322 = vmul.f32 %v314, %v306
        %v323 = vmul.f32 %v315, %v307
        %v324 = vld [vmem:[%s2] sm:$0xff]
        %v325 = vld [vmem:[%s2 + $0x8] sm:$0xff]
        %v326 = vld [vmem:[%s2 + $0x10] sm:$0xff]
        %v327 = vld [vmem:[%s2 + $0x18] sm:$0xff]
        %329 = vset.pattern.permute.xlu0 0
        %330 = vperm.xlu0 %329, %v324
        %v331 = vpop.permute.xlu0 %330
        %334 = vset.pattern.permute.xlu0 0
        %335 = vperm.xlu0 %334, %v325
        %v336 = vpop.permute.xlu0 %335
        %339 = vset.pattern.permute.xlu0 0
        %340 = vperm.xlu0 %339, %v326
        %v341 = vpop.permute.xlu0 %340
        %344 = vset.pattern.permute.xlu0 0
        %345 = vperm.xlu0 %344, %v327
        %v346 = vpop.permute.xlu0 %345
        %v348 = vadd.f32 %v316, %v331
        %v349 = vadd.f32 %v317, %v331
        %v350 = vadd.f32 %v318, %v336
        %v351 = vadd.f32 %v319, %v336
        %v352 = vadd.f32 %v320, %v341
        %v353 = vadd.f32 %v321, %v341
        %v354 = vadd.f32 %v322, %v346
        %v355 = vadd.f32 %v323, %v346
        %356 = vst [vmem:[%s206] sm:$0xff] %v348
        %357 = vst [vmem:[%s206 + $0x8] sm:$0xff] %v349
        %358 = vst [vmem:[%s206 + $0x10] sm:$0xff] %v350
        %359 = vst [vmem:[%s206 + $0x18] sm:$0xff] %v351
        %360 = vst [vmem:[%s206 + $0x20] sm:$0xff] %v352
        %361 = vst [vmem:[%s206 + $0x28] sm:$0xff] %v353
        %362 = vst [vmem:[%s206 + $0x30] sm:$0xff] %v354
        %363 = vst [vmem:[%s206 + $0x38] sm:$0xff] %v355
        %s364 = sand.u32 %s112, 1
        %s365 = scalar_lea.sflag [#allocation4], %s364
        %s366 = sand.u32 %s112, 1
        %s367 = smul.addr %s366, 64
        %s368 = scalar_lea.vmem [#allocation5], %s367
        // Predicated region
        $region37: #{tpu_custom_call.1} parent=31 // pred_check
          %p369 = pneg %p122
        $region38: #{tpu_custom_call.1} parent=31 // pred_check_branch
          %371 = sbr.rel (%p369) target = $region40
        $region39: #{tpu_custom_call.1} parent=31 // pred_region
          %s372 = smul.u32 2, %s25
          %s374 = ssub.s32 1024, 1024
          %375 = vsyncadd %s365, %s374
          %s376 = smul.addr %s24, 8
          %s377 = sadd.s32 %s372, %s376
          %s378 = smul.addr %s377, 128
          %s379 = scalar_lea.hbm %s3, %s378
          %s380 = sshll.u32 %s368, 4
          %s381 = int_to_ptr.vmem [resolvable:$true] %s380
          %386 = dma.vmem_to_hbm [thread:$0]  %s381, 1024, %s379, %s365, 256, 256, 16
        $region40: #{tpu_custom_call.1} parent=31 // pred_fallthru
          _
      $region32: #{tpu_custom_call.1} parent=5 // pred_fallthru
        _
      %p387 = scmp.le.s32.totalorder 2, %s15
      // Predicated region
      $region41: #{tpu_custom_call.1} parent=5 // pred_check
        %p388 = pneg %p387
      $region42: #{tpu_custom_call.1} parent=5 // pred_check_branch
        %390 = sbr.rel (%p388) target = $region44
      $region43: #{tpu_custom_call.1} parent=5 // pred_region
        %s391 = ssub.s32 %s15, 2
        // Predicated region
        $region45: #{tpu_custom_call.1} parent=43 // pred_check
          %p392 = pneg %p128
        $region46: #{tpu_custom_call.1} parent=43 // pred_check_branch
          %394 = sbr.rel (%p392) target = $region48
        $region47: #{tpu_custom_call.1} parent=43 // pred_region
          %s395 = sand.u32 %s113, 1
          %s396 = scalar_lea.sflag [#allocation4], %s395
          %s397 = sand.u32 %s113, 1
          %s398 = smul.addr %s397, 64
          %s399 = scalar_lea.vmem [#allocation5], %s398
          %400 = dma.done %s396, 1024
        $region48: #{tpu_custom_call.1} parent=43 // pred_fallthru
          _
      $region44: #{tpu_custom_call.1} parent=5 // pred_fallthru
        _
    $region6: #{tpu_custom_call.1} parent=1 // loop_footer
      %s19 = sadd.s32 1, %s15
    $region7: #{tpu_custom_call.1} parent=1 // loop_footer_branch
      %14 = sbr.rel target = $region3
    $region8: #{tpu_custom_call.1} parent=1 // loop_exit
      _
    %401 = vsyncpa [#allocation3], 1
    %s402 = scalar_lea.sflag [#allocation3], 1
    %403 = vsyncpa %s402, 1
    %404 = vsyncpa [#allocation4], 1
    %s405 = scalar_lea.sflag [#allocation4], 1
    %406 = vsyncpa %s405, 1

</llo_original>
